<compile_context>
chip_gen: v7x
topology: tpu7x:2x2x1
jax: 0.10.0
libtpu: 0.0.40
codegen_flags: <defaults>
</compile_context>

<pallas_src>
import functools

import jax
import jax.numpy as jnp
from jax.experimental import pallas as pl
from jax.experimental.pallas import tpu as pltpu


# ----------------------------- Pallas kernel ------------------------------ #
def _dwc_patch_embed_kernel(x_ref, wdw_ref, mask_ref, wpw_ref, bias_ref,
                            o_ref, xp_ref, *dws_scratch,
                            ksize, pad, height, width, stride):
    """Fused depthwise-KxK + pointwise-1x1 + BN + Hardswish for one image.

    x_ref    : (C,  H*W)       image, channels-first, flat row-major HW
    wdw_ref  : (C,  K*K)       depthwise weights, tap t = kh*K + kw     (f32)
    mask_ref : (K,  1, NC)     per-kw column-validity masks             (f32)
    wpw_ref  : (Cout, C)       pointwise weight with BN scale folded    (bf16)
    bias_ref : (Cout, 1)       folded BN bias                           (f32)
    o_ref    : (Cout, Ho*Wo)
    xp_ref   : (C, H*W + 2*(pad*W+pad))  scratch: flat zero-padded image
    dws_scratch (stride>1 only): (C, Ho*Wo) bf16 staging for the matmul RHS

    NC = H*Wo (column-subsampled positions over all rows) if stride>1 else H*W.
    """
    hw = height * width
    off0 = pad * width + pad
    c = xp_ref.shape[0]

    # Zero only the two pad strips; the interior is fully overwritten below.
    # TODO(synk): DMA-ing the HBM image straight into xp_ref (memory_space=
    # pl.ANY + make_async_copy into a double-buffered xp) would also remove
    # this VMEM->VMEM copy, but needs a lane-misaligned DMA destination; kept
    # as the auto-pipelined BlockSpec copy for robustness.
    if pad > 0:
        strip = jnp.zeros((c, off0), dtype=xp_ref.dtype)
        xp_ref[:, :off0] = strip
        xp_ref[:, off0 + hw:] = strip
    xp_ref[:, off0:off0 + hw] = x_ref[...].astype(xp_ref.dtype)

    if stride > 1:
        wo = width // stride
        ho = (height + stride - 1) // stride
        n_cols = height * wo          # column-subsampled positions, all rows
    else:
        n_cols = hw

    # Depthwise KxK conv accumulated fully in registers (no scratch RMW).
    # Each tap is a shifted slice of the flat padded image (strided when
    # stride>1, which performs the column subsample for free), scaled by its
    # per-channel tap weight.  Horizontal taps that fall outside a row wrap
    # into the neighbouring row in the flat layout; the per-kw column mask
    # zeroes those positions.  Vertical out-of-range taps read the flat zero
    # padding.
    # TODO(synk): on v6e/v7x this tap math could run in bf16 (halves VALU
    # passes); kept f32 so the same kernel stays optimal on v5e.
    # TODO(synk): for large W, padding each row of xp to a 128-lane multiple
    # would make the kh offsets vreg-aligned; skipped for MPViT-scale W.
    dw = None
    for kw in range(ksize):
        acc = None
        for kh in range(ksize):
            t = kh * ksize + kw
            off = kh * width + kw
            if stride > 1:
                tap = xp_ref[:, pl.ds(off, n_cols, stride=stride)]
            else:
                tap = xp_ref[:, off:off + hw]
            contrib = tap * wdw_ref[:, t:t + 1]        # (C,1) lane broadcast
            acc = contrib if acc is None else acc + contrib
        if kw != pad:                       # centre column never needs a mask
            acc = acc * mask_ref[kw]                   # (1,NC) sublane bcast
        dw = acc if dw is None else dw + acc

    # stride>1: keep only every stride-th row before the matmul (columns were
    # already subsampled at tap-read time), staged through a small bf16
    # scratch so the pointwise matmul / HBM writeback shrink by stride^2.
    if stride > 1:
        dws_ref = dws_scratch[0]
        for ri in range(ho):
            src = ri * stride * wo
            dws_ref[:, ri * wo:(ri + 1) * wo] = \
                dw[:, src:src + wo].astype(dws_ref.dtype)
        rhs = dws_ref[...]
    else:
        rhs = dw.astype(wpw_ref.dtype)

    # Pointwise 1x1 conv: bf16 MXU operands, f32 accumulation; folded BN bias
    # and Hardswish (y * clip(y+3, 0, 6) / 6) in f32, then the final cast.
    y = jnp.dot(wpw_ref[...], rhs, preferred_element_type=jnp.float32)
    y = y + bias_ref[...]
    y = y * jnp.clip(y + 3.0, 0.0, 6.0) * (1.0 / 6.0)
    o_ref[...] = y.astype(o_ref.dtype)


# -------------------------------- Wrapper ---------------------------------- #
@functools.partial(jax.jit, static_argnames=("stride", "eps"))
def dwc_patch_embed(x, dw_weight, pw_weight, bn_gamma, bn_beta,
                    bn_mean, bn_var, *, stride=1, eps=1e-5):
    """DWCPatchEmbed forward (NCHW in / NCHW out, BatchNorm eval mode)."""
    n, cin, h, w = x.shape
    cout, cpg, k, k2 = dw_weight.shape
    assert k == k2
    # TODO(synk): only the true-depthwise case (in_ch == out_ch, groups=out_ch)
    # used by MPViT is implemented; the grouped in_ch = m*out_ch case is not.
    assert cin == cout and cpg == 1, "depthwise path requires in_ch == out_ch"
    # TODO(synk): even kernel sizes (output H-1 x W-1) are not implemented.
    assert k % 2 == 1, "kernel_size must be odd"
    pad = (k - 1) // 2
    hw = h * w
    c = cout
    f32 = jnp.float32

    # In-kernel stride (subsample before the pointwise matmul) needs W % s == 0
    # so the kept columns form one strided progression of the flat layout;
    # otherwise fall back to subsampling the stride-1 result in the wrapper.
    kstride = stride if (stride > 1 and w % stride == 0) else 1
    wo = w // kstride
    ho = (h + kstride - 1) // kstride
    out_hw = ho * wo
    n_cols = h * wo

    # Fold BN (eval-mode running stats) into the pointwise weight and a bias.
    # Pointwise operands are bf16 (MXU-native); accumulation stays f32.
    scale = bn_gamma.astype(f32) / jnp.sqrt(bn_var.astype(f32) + eps)   # (C,)
    w_pw_eff = (pw_weight.reshape(c, c).astype(f32)
                * scale[:, None]).astype(jnp.bfloat16)                  # (Cout,C)
    bias = (bn_beta.astype(f32) - bn_mean.astype(f32) * scale).reshape(c, 1)

    w_dw = dw_weight.reshape(c, k * k).astype(f32)                      # (C,K*K)

    # Column-validity masks evaluated at the kept columns, tiled over all rows.
    cols = jnp.arange(0, w, kstride)
    masks = []
    for kw in range(k):
        valid = (cols + (kw - pad) >= 0) & (cols + (kw - pad) < w)
        masks.append(jnp.tile(valid.astype(f32), h))                    # (H*Wo,)
    mask_arr = jnp.stack(masks).reshape(k, 1, n_cols)                   # (K,1,NC)

    # NCHW -> (N, C, H*W): contiguous view, no HBM copy / transpose.
    x_flat = x.reshape(n, c, hw)
    hw_padded = hw + 2 * (pad * w + pad)

    kernel = functools.partial(_dwc_patch_embed_kernel, ksize=k, pad=pad,
                               height=h, width=w, stride=kstride)

    scratch_shapes = [pltpu.VMEM((c, hw_padded), jnp.float32)]
    if kstride > 1:
        scratch_shapes.append(pltpu.VMEM((c, out_hw), jnp.bfloat16))

    # Size the VMEM limit from the real footprint (double-buffered blocks +
    # scratch) instead of a hard-coded 48 MiB (v7x has only 64 MiB per TC).
    bx = x.dtype.itemsize
    footprint = (2 * c * hw * bx                      # image blocks (2 bufs)
                 + 2 * c * out_hw * bx                # output blocks (2 bufs)
                 + 2 * (c * k * k * 4 + k * n_cols * 4 + c * c * 2 + c * 4)
                 + c * hw_padded * 4                  # padded-image scratch
                 + (c * out_hw * 2 if kstride > 1 else 0))
    vmem_limit = int(min(max(footprint * 5 // 4 + (2 << 20), 16 << 20),
                         64 << 20))

    # TODO(synk): for stage-1-scale inputs (very large C*H*W) a second
    # "parallel" grid axis tiling H into row blocks with a pad-row halo is
    # needed to stay inside VMEM; it would also feed both v7x TensorCores when
    # N == 1.
    out_flat = pl.pallas_call(
        kernel,
        out_shape=jax.ShapeDtypeStruct((n, c, out_hw), x.dtype),
        grid_spec=pltpu.PrefetchScalarGridSpec(
            num_scalar_prefetch=0,
            grid=(n,),
            in_specs=[
                pl.BlockSpec((None, c, hw), lambda i: (i, 0, 0)),   # image
                pl.BlockSpec((c, k * k), lambda i: (0, 0)),         # dw weight
                pl.BlockSpec((k, 1, n_cols), lambda i: (0, 0, 0)),  # col masks
                pl.BlockSpec((c, c), lambda i: (0, 0)),             # pw weight
                pl.BlockSpec((c, 1), lambda i: (0, 0)),             # BN bias
            ],
            out_specs=pl.BlockSpec((None, c, out_hw), lambda i: (i, 0, 0)),
            scratch_shapes=scratch_shapes,
        ),
        compiler_params=pltpu.CompilerParams(
            dimension_semantics=("parallel",),
            vmem_limit_bytes=vmem_limit,
        ),
    )(x_flat, w_dw, mask_arr, w_pw_eff, bias)

    out = out_flat.reshape(n, c, ho, wo)         # free view back to NCHW
    if stride > 1 and kstride == 1:
        # TODO(synk): fallback for W % stride != 0 subsamples the stride-1
        # result outside the kernel (stride^2 extra work on that rare shape).
        out = out[:, :, ::stride, ::stride]
    return out


# ------------------------------- Reference --------------------------------- #
def dwc_patch_embed_ref(x, dw_weight, pw_weight, bn_gamma, bn_beta,
                        bn_mean, bn_var, stride=1, eps=1e-5):
    c = dw_weight.shape[0]
    k = dw_weight.shape[-1]
    p = (k - 1) // 2
    hp = jax.lax.Precision.HIGHEST
    y = jax.lax.conv_general_dilated(
        x.astype(jnp.float32), dw_weight.astype(jnp.float32),
        window_strides=(stride, stride), padding=((p, p), (p, p)),
        dimension_numbers=("NCHW", "OIHW", "NCHW"),
        feature_group_count=c, precision=hp)
    y = jax.lax.conv_general_dilated(
        y, pw_weight.astype(jnp.float32),
        window_strides=(1, 1), padding="VALID",
        dimension_numbers=("NCHW", "OIHW", "NCHW"), precision=hp)
    scale = bn_gamma / jnp.sqrt(bn_var + eps)
    bias = bn_beta - bn_mean * scale
    y = y * scale.reshape(1, -1, 1, 1) + bias.reshape(1, -1, 1, 1)
    return y * jnp.clip(y + 3.0, 0.0, 6.0) / 6.0


# --------------------------------- Main ------------------------------------ #
if __name__ == "__main__":
    key = jax.random.PRNGKey(0)
    k_x, k_dw, k_pw, k_g, k_b, k_m, k_v = jax.random.split(key, 7)

    # MPViT uses DWCPatchEmbed with in_chans == embed_dim and patch_size=3.
    N, C, H, W = 2, 32, 16, 16
    K = 3

    x = jax.random.normal(k_x, (N, C, H, W), dtype=jnp.float32)

    # Conv init from the module: normal(0, sqrt(2 / (k*k*out_ch))).
    dw_w = jax.random.normal(k_dw, (C, 1, K, K), jnp.float32) * \
        jnp.sqrt(2.0 / (K * K * C))
    pw_w = jax.random.normal(k_pw, (C, C, 1, 1), jnp.float32) * \
        jnp.sqrt(2.0 / C)

    # BatchNorm (eval mode): non-trivial running stats / affine params.
    gamma = 1.0 + 0.1 * jax.random.normal(k_g, (C,), jnp.float32)
    beta = 0.1 * jax.random.normal(k_b, (C,), jnp.float32)
    r_mean = 0.1 * jax.random.normal(k_m, (C,), jnp.float32)
    r_var = 1.0 + 0.5 * jax.random.uniform(k_v, (C,), jnp.float32)

    for stride in (1, 2):
        out = dwc_patch_embed(x, dw_w, pw_w, gamma, beta, r_mean, r_var,
                              stride=stride)
        out = jax.block_until_ready(out)
        ref = dwc_patch_embed_ref(x, dw_w, pw_w, gamma, beta, r_mean, r_var,
                                  stride=stride)
        assert out.shape == ref.shape, (out.shape, ref.shape)
        assert jnp.allclose(out, ref, atol=2e-2, rtol=2e-2), \
            float(jnp.max(jnp.abs(out - ref)))

    print("KERNEL_OK")
</pallas_src>

<mosaic_0001>
module attributes {stable_mosaic.version = 11 : i64} {
  func.func @_dwc_patch_embed_kernel(%arg0: i32, %arg1: memref<1x32x256xf32, #tpu.memory_space<vmem>>, %arg2: memref<32x9xf32, #tpu.memory_space<vmem>>, %arg3: memref<3x1x256xf32, #tpu.memory_space<vmem>>, %arg4: memref<32x32xbf16, #tpu.memory_space<vmem>>, %arg5: memref<32x1xf32, #tpu.memory_space<vmem>>, %arg6: memref<1x32x256xf32, #tpu.memory_space<vmem>>, %arg7: memref<32x290xf32, #tpu.memory_space<vmem>>) attributes {dimension_semantics = [#tpu.dimension_semantics<parallel>], iteration_bounds = array<i64: 2>, scalar_prefetch = 0 : i64, scratch_operands = 1 : i64, tpu.core_type = #tpu.core_type<tc>, window_params = [{transform_indices = @transform_0, window_bounds = array<i64: 1, 32, 256>}, {pipeline_mode = #tpu.pipeline_mode<synchronous>, transform_indices = @transform_1, window_bounds = array<i64: 32, 9>}, {pipeline_mode = #tpu.pipeline_mode<synchronous>, transform_indices = @transform_2, window_bounds = array<i64: 3, 1, 256>}, {pipeline_mode = #tpu.pipeline_mode<synchronous>, transform_indices = @transform_3, window_bounds = array<i64: 32, 32>}, {pipeline_mode = #tpu.pipeline_mode<synchronous>, transform_indices = @transform_4, window_bounds = array<i64: 32, 1>}, {transform_indices = @transform_5, window_bounds = array<i64: 1, 32, 256>}]} {
    %cst = arith.constant 0.000000e+00 : f32
    %0 = vector.broadcast %cst : f32 to vector<32x17xf32>
    %c0 = arith.constant 0 : index
    %c0_0 = arith.constant 0 : index
    %1 = vector.load %arg7[%c0, %c0_0] : memref<32x290xf32, #tpu.memory_space<vmem>>, vector<32x17xf32>
    tpu.vector_store %arg7[%c0, %c0_0], %0 {strides = array<i32>} : memref<32x290xf32, #tpu.memory_space<vmem>>, vector<32x17xf32>,
    %c0_1 = arith.constant 0 : index
    %c273 = arith.constant 273 : index
    %2 = vector.load %arg7[%c0_1, %c273] : memref<32x290xf32, #tpu.memory_space<vmem>>, vector<32x17xf32>
    tpu.vector_store %arg7[%c0_1, %c273], %0 {strides = array<i32>} : memref<32x290xf32, #tpu.memory_space<vmem>>, vector<32x17xf32>,
    %c0_2 = arith.constant 0 : index
    %c0_3 = arith.constant 0 : index
    %c0_4 = arith.constant 0 : index
    %3 = vector.load %arg1[%c0_2, %c0_3, %c0_4] : memref<1x32x256xf32, #tpu.memory_space<vmem>>, vector<1x32x256xf32>
    %4 = vector.shape_cast %3 : vector<1x32x256xf32> to vector<32x256xf32>
    %c0_5 = arith.constant 0 : index
    %c17 = arith.constant 17 : index
    %5 = vector.load %arg7[%c0_5, %c17] : memref<32x290xf32, #tpu.memory_space<vmem>>, vector<32x256xf32>
    tpu.vector_store %arg7[%c0_5, %c17], %4 {strides = array<i32>} : memref<32x290xf32, #tpu.memory_space<vmem>>, vector<32x256xf32>,
    %c0_6 = arith.constant 0 : index
    %c0_7 = arith.constant 0 : index
    %6 = vector.load %arg7[%c0_6, %c0_7] : memref<32x290xf32, #tpu.memory_space<vmem>>, vector<32x256xf32>
    %c0_8 = arith.constant 0 : index
    %c0_9 = arith.constant 0 : index
    %7 = vector.load %arg2[%c0_8, %c0_9] : memref<32x9xf32, #tpu.memory_space<vmem>>, vector<32x1xf32>
    %8 = vector.broadcast %7 : vector<32x1xf32> to vector<32x256xf32>
    %9 = arith.mulf %6, %8 : vector<32x256xf32>
    %c0_10 = arith.constant 0 : index
    %c16 = arith.constant 16 : index
    %10 = vector.load %arg7[%c0_10, %c16] : memref<32x290xf32, #tpu.memory_space<vmem>>, vector<32x256xf32>
    %c0_11 = arith.constant 0 : index
    %c3 = arith.constant 3 : index
    %11 = vector.load %arg2[%c0_11, %c3] : memref<32x9xf32, #tpu.memory_space<vmem>>, vector<32x1xf32>
    %12 = vector.broadcast %11 : vector<32x1xf32> to vector<32x256xf32>
    %13 = arith.mulf %10, %12 : vector<32x256xf32>
    %14 = arith.addf %9, %13 : vector<32x256xf32>
    %c0_12 = arith.constant 0 : index
    %c32 = arith.constant 32 : index
    %15 = vector.load %arg7[%c0_12, %c32] : memref<32x290xf32, #tpu.memory_space<vmem>>, vector<32x256xf32>
    %c0_13 = arith.constant 0 : index
    %c6 = arith.constant 6 : index
    %16 = vector.load %arg2[%c0_13, %c6] : memref<32x9xf32, #tpu.memory_space<vmem>>, vector<32x1xf32>
    %17 = vector.broadcast %16 : vector<32x1xf32> to vector<32x256xf32>
    %18 = arith.mulf %15, %17 : vector<32x256xf32>
    %19 = arith.addf %14, %18 : vector<32x256xf32>
    %c0_14 = arith.constant 0 : index
    %c0_15 = arith.constant 0 : index
    %c0_16 = arith.constant 0 : index
    %20 = vector.load %arg3[%c0_14, %c0_15, %c0_16] : memref<3x1x256xf32, #tpu.memory_space<vmem>>, vector<1x1x256xf32>
    %21 = vector.shape_cast %20 : vector<1x1x256xf32> to vector<1x256xf32>
    %22 = vector.broadcast %21 : vector<1x256xf32> to vector<32x256xf32>
    %23 = arith.mulf %19, %22 : vector<32x256xf32>
    %c0_17 = arith.constant 0 : index
    %c1 = arith.constant 1 : index
    %24 = vector.load %arg7[%c0_17, %c1] : memref<32x290xf32, #tpu.memory_space<vmem>>, vector<32x256xf32>
    %c0_18 = arith.constant 0 : index
    %c1_19 = arith.constant 1 : index
    %25 = vector.load %arg2[%c0_18, %c1_19] : memref<32x9xf32, #tpu.memory_space<vmem>>, vector<32x1xf32>
    %26 = vector.broadcast %25 : vector<32x1xf32> to vector<32x256xf32>
    %27 = arith.mulf %24, %26 : vector<32x256xf32>
    %c0_20 = arith.constant 0 : index
    %c17_21 = arith.constant 17 : index
    %28 = vector.load %arg7[%c0_20, %c17_21] : memref<32x290xf32, #tpu.memory_space<vmem>>, vector<32x256xf32>
    %c0_22 = arith.constant 0 : index
    %c4 = arith.constant 4 : index
    %29 = vector.load %arg2[%c0_22, %c4] : memref<32x9xf32, #tpu.memory_space<vmem>>, vector<32x1xf32>
    %30 = vector.broadcast %29 : vector<32x1xf32> to vector<32x256xf32>
    %31 = arith.mulf %28, %30 : vector<32x256xf32>
    %32 = arith.addf %27, %31 : vector<32x256xf32>
    %c0_23 = arith.constant 0 : index
    %c33 = arith.constant 33 : index
    %33 = vector.load %arg7[%c0_23, %c33] : memref<32x290xf32, #tpu.memory_space<vmem>>, vector<32x256xf32>
    %c0_24 = arith.constant 0 : index
    %c7 = arith.constant 7 : index
    %34 = vector.load %arg2[%c0_24, %c7] : memref<32x9xf32, #tpu.memory_space<vmem>>, vector<32x1xf32>
    %35 = vector.broadcast %34 : vector<32x1xf32> to vector<32x256xf32>
    %36 = arith.mulf %33, %35 : vector<32x256xf32>
    %37 = arith.addf %32, %36 : vector<32x256xf32>
    %38 = arith.addf %23, %37 : vector<32x256xf32>
    %c0_25 = arith.constant 0 : index
    %c2 = arith.constant 2 : index
    %39 = vector.load %arg7[%c0_25, %c2] : memref<32x290xf32, #tpu.memory_space<vmem>>, vector<32x256xf32>
    %c0_26 = arith.constant 0 : index
    %c2_27 = arith.constant 2 : index
    %40 = vector.load %arg2[%c0_26, %c2_27] : memref<32x9xf32, #tpu.memory_space<vmem>>, vector<32x1xf32>
    %41 = vector.broadcast %40 : vector<32x1xf32> to vector<32x256xf32>
    %42 = arith.mulf %39, %41 : vector<32x256xf32>
    %c0_28 = arith.constant 0 : index
    %c18 = arith.constant 18 : index
    %43 = vector.load %arg7[%c0_28, %c18] : memref<32x290xf32, #tpu.memory_space<vmem>>, vector<32x256xf32>
    %c0_29 = arith.constant 0 : index
    %c5 = arith.constant 5 : index
    %44 = vector.load %arg2[%c0_29, %c5] : memref<32x9xf32, #tpu.memory_space<vmem>>, vector<32x1xf32>
    %45 = vector.broadcast %44 : vector<32x1xf32> to vector<32x256xf32>
    %46 = arith.mulf %43, %45 : vector<32x256xf32>
    %47 = arith.addf %42, %46 : vector<32x256xf32>
    %c0_30 = arith.constant 0 : index
    %c34 = arith.constant 34 : index
    %48 = vector.load %arg7[%c0_30, %c34] : memref<32x290xf32, #tpu.memory_space<vmem>>, vector<32x256xf32>
    %c0_31 = arith.constant 0 : index
    %c8 = arith.constant 8 : index
    %49 = vector.load %arg2[%c0_31, %c8] : memref<32x9xf32, #tpu.memory_space<vmem>>, vector<32x1xf32>
    %50 = vector.broadcast %49 : vector<32x1xf32> to vector<32x256xf32>
    %51 = arith.mulf %48, %50 : vector<32x256xf32>
    %52 = arith.addf %47, %51 : vector<32x256xf32>
    %c2_32 = arith.constant 2 : index
    %c0_33 = arith.constant 0 : index
    %c0_34 = arith.constant 0 : index
    %53 = vector.load %arg3[%c2_32, %c0_33, %c0_34] : memref<3x1x256xf32, #tpu.memory_space<vmem>>, vector<1x1x256xf32>
    %54 = vector.shape_cast %53 : vector<1x1x256xf32> to vector<1x256xf32>
    %55 = vector.broadcast %54 : vector<1x256xf32> to vector<32x256xf32>
    %56 = arith.mulf %52, %55 : vector<32x256xf32>
    %57 = arith.addf %38, %56 : vector<32x256xf32>
    %58 = arith.truncf %57 : vector<32x256xf32> to vector<32x256xbf16>
    %c0_35 = arith.constant 0 : index
    %c0_36 = arith.constant 0 : index
    %59 = vector.load %arg4[%c0_35, %c0_36] : memref<32x32xbf16, #tpu.memory_space<vmem>>, vector<32x32xbf16>
    %cst_37 = arith.constant dense<0.000000e+00> : vector<32x256xf32>
    %60 = tpu.matmul %59, %58, %cst_37 {dimension_numbers = #tpu.dot_dimension_numbers<[1], [0], [0], [1], [0, 0, 1, 1], [], []>} : vector<32x32xbf16>, vector<32x256xbf16>, vector<32x256xf32> -> vector<32x256xf32>
    %c0_38 = arith.constant 0 : index
    %c0_39 = arith.constant 0 : index
    %61 = vector.load %arg5[%c0_38, %c0_39] : memref<32x1xf32, #tpu.memory_space<vmem>>, vector<32x1xf32>
    %62 = vector.broadcast %61 : vector<32x1xf32> to vector<32x256xf32>
    %63 = arith.addf %60, %62 : vector<32x256xf32>
    %cst_40 = arith.constant 3.000000e+00 : f32
    %64 = vector.broadcast %cst_40 : f32 to vector<32x256xf32>
    %65 = arith.addf %63, %64 : vector<32x256xf32>
    %cst_41 = arith.constant 0.000000e+00 : f32
    %cst_42 = arith.constant 6.000000e+00 : f32
    %66 = vector.broadcast %cst_41 : f32 to vector<32x256xf32>
    %67 = arith.maximumf %66, %65 : vector<32x256xf32>
    %68 = vector.broadcast %cst_42 : f32 to vector<32x256xf32>
    %69 = arith.minimumf %68, %67 : vector<32x256xf32>
    %70 = arith.mulf %63, %69 : vector<32x256xf32>
    %cst_43 = arith.constant 0.166666672 : f32
    %71 = vector.broadcast %cst_43 : f32 to vector<32x256xf32>
    %72 = arith.mulf %70, %71 : vector<32x256xf32>
    %c0_44 = arith.constant 0 : index
    %c0_45 = arith.constant 0 : index
    %c0_46 = arith.constant 0 : index
    %73 = vector.load %arg6[%c0_44, %c0_45, %c0_46] : memref<1x32x256xf32, #tpu.memory_space<vmem>>, vector<1x32x256xf32>
    %74 = vector.shape_cast %73 : vector<1x32x256xf32> to vector<32x256xf32>
    %75 = vector.shape_cast %72 : vector<32x256xf32> to vector<1x32x256xf32>
    tpu.vector_store %arg6[%c0_44, %c0_45, %c0_46], %75 {strides = array<i32>} : memref<1x32x256xf32, #tpu.memory_space<vmem>>, vector<1x32x256xf32>,
    return
  }
  func.func @transform_0(%arg0: i32) -> (i32, i32, i32) {
    %c0_i32 = arith.constant 0 : i32
    %c0_i32_0 = arith.constant 0 : i32
    %c0_i32_1 = arith.constant 0 : i32
    return %arg0, %c0_i32, %c0_i32_0 : i32, i32, i32
  }
  func.func @transform_1(%arg0: i32) -> (i32, i32) {
    %c0_i32 = arith.constant 0 : i32
    %c0_i32_0 = arith.constant 0 : i32
    %c0_i32_1 = arith.constant 0 : i32
    return %c0_i32, %c0_i32_0 : i32, i32
  }
  func.func @transform_2(%arg0: i32) -> (i32, i32, i32) {
    %c0_i32 = arith.constant 0 : i32
    %c0_i32_0 = arith.constant 0 : i32
    %c0_i32_1 = arith.constant 0 : i32
    %c0_i32_2 = arith.constant 0 : i32
    return %c0_i32, %c0_i32_0, %c0_i32_1 : i32, i32, i32
  }
  func.func @transform_3(%arg0: i32) -> (i32, i32) {
    %c0_i32 = arith.constant 0 : i32
    %c0_i32_0 = arith.constant 0 : i32
    %c0_i32_1 = arith.constant 0 : i32
    return %c0_i32, %c0_i32_0 : i32, i32
  }
  func.func @transform_4(%arg0: i32) -> (i32, i32) {
    %c0_i32 = arith.constant 0 : i32
    %c0_i32_0 = arith.constant 0 : i32
    %c0_i32_1 = arith.constant 0 : i32
    return %c0_i32, %c0_i32_0 : i32, i32
  }
  func.func @transform_5(%arg0: i32) -> (i32, i32, i32) {
    %c0_i32 = arith.constant 0 : i32
    %c0_i32_0 = arith.constant 0 : i32
    %c0_i32_1 = arith.constant 0 : i32
    return %arg0, %c0_i32, %c0_i32_0 : i32, i32, i32
  }
}

</mosaic_0001>

<llo_original>
// kernel: tile.26
$region0: #{tile.26}
  #allocation0 [shape = 's32[1]{0}', space=sflag, size = 0x4, scoped, tag = 'scoped memory for tile.26']
  %s0 = inlined_call_operand.vmem [shape: f32[16], index: 0, kind: input, shape index: {}]
  %s1 = inlined_call_operand.vmem [shape: f32[16,16], index: 1, kind: output, shape index: {}]
  // Predicated region
  $region2: #{tile.26} parent=0 // pred_check
    _
  $region3: #{tile.26} parent=0 // pred_check_branch
    %3 = sbr.rel (0) target = $region5
  $region4: #{tile.26} parent=0 // pred_region
    _
  $region5: #{tile.26} parent=0 // pred_fallthru
    _
  %v4 = vld [vmem:[%s0] ss:$0 sm:$0xff]
  %5 = vst [vmem:[%s1] sm:$0xff] %v4
  %s6 = scalar_lea.vmem %s1, 8
  %7 = vst [vmem:[%s6] sm:$0xff] %v4

// kernel: tile.29
$region0: #{tile.29}
  %s0 = inlined_call_operand.vmem [shape: f32[16,16], index: 0, kind: input, shape index: {}]
  %s1 = inlined_call_operand.vmem [shape: f32[1,256], index: 1, kind: output, shape index: {}]
  $region1: #{tile.29} parent=0
    #allocation0 [shape = 'u8[8192]{0}', space=vmem, size = 0x2000, scoped, tag = 'scoped mem for output reshape']
    %s2 = smov 3
    %v3 = vld [vmem:[%s0] ss:$8 sm:%s2]
    %vm4 = vcmask 130048
    %5 = vst.msk [vmem:[#allocation0] ss:$8 sm:$0x3] %vm4, %v3
    %s6 = scalar_lea.vmem %s0, 7
    %s7 = smov 3
    %v8 = vld [vmem:[%s6] ss:$8 sm:%s7]
    %9 = vrot.lane.b32.xlu0 %v8, 112
    %v10 = vpop.permute.xlu0 %9
    %vm11 = vcmask 1048448
    %12 = vst.msk [vmem:[#allocation0] ss:$8 sm:$0x3] %vm11, %v10
    %s13 = scalar_lea.vmem %s0, 6
    %s14 = smov 3
    %v15 = vld [vmem:[%s13] ss:$8 sm:%s14]
    %16 = vrot.lane.b32.xlu0 %v15, 96
    %v17 = vpop.permute.xlu0 %16
    %vm18 = vcmask 917248
    %19 = vst.msk [vmem:[#allocation0] ss:$8 sm:$0x3] %vm18, %v17
    %s20 = scalar_lea.vmem %s0, 5
    %s21 = smov 3
    %v22 = vld [vmem:[%s20] ss:$8 sm:%s21]
    %23 = vrot.lane.b32.xlu0 %v22, 80
    %v24 = vpop.permute.xlu0 %23
    %vm25 = vcmask 786048
    %26 = vst.msk [vmem:[#allocation0] ss:$8 sm:$0x3] %vm25, %v24
    %s27 = scalar_lea.vmem %s0, 4
    %s28 = smov 3
    %v29 = vld [vmem:[%s27] ss:$8 sm:%s28]
    %30 = vrot.lane.b32.xlu0 %v29, 64
    %v31 = vpop.permute.xlu0 %30
    %vm32 = vcmask 654848
    %33 = vst.msk [vmem:[#allocation0] ss:$8 sm:$0x3] %vm32, %v31
    %s34 = scalar_lea.vmem %s0, 3
    %s35 = smov 3
    %v36 = vld [vmem:[%s34] ss:$8 sm:%s35]
    %37 = vrot.lane.b32.xlu0 %v36, 48
    %v38 = vpop.permute.xlu0 %37
    %vm39 = vcmask 523648
    %40 = vst.msk [vmem:[#allocation0] ss:$8 sm:$0x3] %vm39, %v38
    %s41 = scalar_lea.vmem %s0, 2
    %s42 = smov 3
    %v43 = vld [vmem:[%s41] ss:$8 sm:%s42]
    %44 = vrot.lane.b32.xlu0 %v43, 32
    %v45 = vpop.permute.xlu0 %44
    %vm46 = vcmask 392448
    %47 = vst.msk [vmem:[#allocation0] ss:$8 sm:$0x3] %vm46, %v45
    %s48 = scalar_lea.vmem %s0, 1
    %s49 = smov 3
    %v50 = vld [vmem:[%s48] ss:$8 sm:%s49]
    %51 = vrot.lane.b32.xlu0 %v50, 16
    %v52 = vpop.permute.xlu0 %51
    %vm53 = vcmask 261248
    %54 = vst.msk [vmem:[#allocation0] ss:$8 sm:$0x3] %vm53, %v52
    %s56 = sshllo.u32 0, 1
    %v58 = vld [vmem:[#allocation0] sm:%s56]
    %s59 = sshllo.u32 0, 1
    %60 = vst [vmem:[%s1] sm:%s59] %v58
    %s61 = scalar_lea.vmem [#allocation0], 8
    %v62 = vld [vmem:[%s61] sm:%s56]
    %s63 = sshllo.u32 0, 1
    %s64 = scalar_lea.vmem %s1, 1
    %65 = vst [vmem:[%s64] sm:%s63] %v62

// kernel: dwc_patch_embed.1
$region0: #{dwc_patch_embed.1}
  #allocation0 [shape = 'u32[]', space=smem, size = 0x4, offset = 0x4, fixed_abs, tag = 'smem constant byte address 0x4 - core index']
  #allocation1 [shape = 'u32[144,128]{1,0:T(1,128)}', space=vmem, size = 0x12000, scoped, tag = 'internal scratch']
  #allocation2 [shape = 'f32[32,290]{1,0:T(8,128)}', space=vmem, size = 0xc000, scoped, tag = 'scratch operand']
  %s0 = inlined_call_operand.vmem [shape: f32[2,32,256], index: 0, kind: input, shape index: {}]
  %s1 = inlined_call_operand.vmem [shape: f32[32,9], index: 1, kind: input, shape index: {}]
  %s2 = inlined_call_operand.vmem [shape: f32[3,1,256], index: 2, kind: input, shape index: {}]
  %s3 = inlined_call_operand.vmem [shape: bf16[32,32], index: 3, kind: input, shape index: {}]
  %s4 = inlined_call_operand.vmem [shape: f32[32,1], index: 4, kind: input, shape index: {}]
  %s5 = inlined_call_operand.vmem [shape: f32[2,32,256], index: 5, kind: output, shape index: {}]
  %s6 = sld [smem:[#allocation0]]
  $region53: #{dwc_patch_embed.1} parent=0
    _
  %s8 = ssub.s32 1, %s6
  %s9 = scalar_select 0, %s8, %s6
  loop: start=0, step=1, limit=4
  $region2: #{dwc_patch_embed.1} parent=0 // loop_pre_header
    _
  $region3: #{dwc_patch_embed.1} parent=0 // loop_header
    %s11 = sphi 0, %s15
    %p12 = scmp.ge.s32.totalorder %s11, 4
    %s21 = sphi 0, %s23
    %s24 = sphi 0, %s21
    %s25 = sphi 0, %s24
    %s41 = sphi 0, %s25
    %s45 = sphi 0, %s45
    %s47 = sphi 0, %s45
    %s48 = sphi 0, %s47
    %s62 = sphi 0, %s48
    %s66 = sphi 0, %s66
    %s68 = sphi 0, %s66
    %s69 = sphi 0, %s68
    %s83 = sphi 0, %s69
    %s87 = sphi 0, %s87
    %s89 = sphi 0, %s87
    %s90 = sphi 0, %s89
    %s104 = sphi 0, %s90
    %s108 = sphi 0, %s108
    %s110 = sphi 0, %s108
    %s111 = sphi 0, %s110
    %s125 = sphi 0, %s111
    %s131 = sphi 0, %s133
    %s134 = sphi 0, %s131
    %s135 = sphi 0, %s134
    %s151 = sphi 0, %s135
  $region4: #{dwc_patch_embed.1} parent=0 // loop_header_branch
    %14 = sbr.rel (%p12) target = $region8
  $region5: #{dwc_patch_embed.1} parent=0 // loop_body
    %s16 = ssub.s32 %s11, 1
    %s17 = ssub.s32 %s11, 2
    %s18 = sadd.s32 %s11, 1
    %s19 = ssub.s32 %s11, %s18
    %p20 = scmp.eq.s32.totalorder %s19, 0
    %s22 = sadd.s32 %s21, 1
    %s23 = scalar_select %p20, %s21, %s22
    %p26 = pneg %p20
    %p27 = scmp.eq.s32.totalorder %s11, 1
    %p28 = por %p26, %p27
    %p29 = scmp.ne.s32.totalorder %s21, %s24
    %p30 = scmp.eq.s32.totalorder %s11, 0
    %p31 = por %p29, %p30
    %p32 = scmp.ne.s32.totalorder %s21, %s24
    %p33 = scmp.eq.s32.totalorder %s16, 1
    %p34 = por %p32, %p33
    %p35 = scmp.ne.s32.totalorder %s24, %s25
    %p36 = scmp.eq.s32.totalorder %s16, 0
    %p37 = por %p35, %p36
    %p38 = scmp.ne.s32.totalorder %s24, %s25
    %p39 = scmp.eq.s32.totalorder %s17, 1
    %p40 = por %p38, %p39
    %p42 = scmp.ne.s32.totalorder %s25, %s41
    %p43 = scmp.eq.s32.totalorder %s17, 0
    %p44 = por %p42, %p43
    %s46 = sadd.s32 %s45, 1
    %p49 = scmp.eq.s32.totalorder %s11, 1
    %p50 = scmp.ne.s32.totalorder %s45, %s47
    %p51 = scmp.eq.s32.totalorder %s11, 0
    %p52 = por %p50, %p51
    %p53 = scmp.ne.s32.totalorder %s45, %s47
    %p54 = scmp.eq.s32.totalorder %s16, 1
    %p55 = por %p53, %p54
    %p56 = scmp.ne.s32.totalorder %s47, %s48
    %p57 = scmp.eq.s32.totalorder %s16, 0
    %p58 = por %p56, %p57
    %p59 = scmp.ne.s32.totalorder %s47, %s48
    %p60 = scmp.eq.s32.totalorder %s17, 1
    %p61 = por %p59, %p60
    %p63 = scmp.ne.s32.totalorder %s48, %s62
    %p64 = scmp.eq.s32.totalorder %s17, 0
    %p65 = por %p63, %p64
    %s67 = sadd.s32 %s66, 1
    %p70 = scmp.eq.s32.totalorder %s11, 1
    %p71 = scmp.ne.s32.totalorder %s66, %s68
    %p72 = scmp.eq.s32.totalorder %s11, 0
    %p73 = por %p71, %p72
    %p74 = scmp.ne.s32.totalorder %s66, %s68
    %p75 = scmp.eq.s32.totalorder %s16, 1
    %p76 = por %p74, %p75
    %p77 = scmp.ne.s32.totalorder %s68, %s69
    %p78 = scmp.eq.s32.totalorder %s16, 0
    %p79 = por %p77, %p78
    %p80 = scmp.ne.s32.totalorder %s68, %s69
    %p81 = scmp.eq.s32.totalorder %s17, 1
    %p82 = por %p80, %p81
    %p84 = scmp.ne.s32.totalorder %s69, %s83
    %p85 = scmp.eq.s32.totalorder %s17, 0
    %p86 = por %p84, %p85
    %s88 = sadd.s32 %s87, 1
    %p91 = scmp.eq.s32.totalorder %s11, 1
    %p92 = scmp.ne.s32.totalorder %s87, %s89
    %p93 = scmp.eq.s32.totalorder %s11, 0
    %p94 = por %p92, %p93
    %p95 = scmp.ne.s32.totalorder %s87, %s89
    %p96 = scmp.eq.s32.totalorder %s16, 1
    %p97 = por %p95, %p96
    %p98 = scmp.ne.s32.totalorder %s89, %s90
    %p99 = scmp.eq.s32.totalorder %s16, 0
    %p100 = por %p98, %p99
    %p101 = scmp.ne.s32.totalorder %s89, %s90
    %p102 = scmp.eq.s32.totalorder %s17, 1
    %p103 = por %p101, %p102
    %p105 = scmp.ne.s32.totalorder %s90, %s104
    %p106 = scmp.eq.s32.totalorder %s17, 0
    %p107 = por %p105, %p106
    %s109 = sadd.s32 %s108, 1
    %p112 = scmp.eq.s32.totalorder %s11, 1
    %p113 = scmp.ne.s32.totalorder %s108, %s110
    %p114 = scmp.eq.s32.totalorder %s11, 0
    %p115 = por %p113, %p114
    %p116 = scmp.ne.s32.totalorder %s108, %s110
    %p117 = scmp.eq.s32.totalorder %s16, 1
    %p118 = por %p116, %p117
    %p119 = scmp.ne.s32.totalorder %s110, %s111
    %p120 = scmp.eq.s32.totalorder %s16, 0
    %p121 = por %p119, %p120
    %p122 = scmp.ne.s32.totalorder %s110, %s111
    %p123 = scmp.eq.s32.totalorder %s17, 1
    %p124 = por %p122, %p123
    %p126 = scmp.ne.s32.totalorder %s111, %s125
    %p127 = scmp.eq.s32.totalorder %s17, 0
    %p128 = por %p126, %p127
    %s129 = ssub.s32 %s11, %s18
    %p130 = scmp.eq.s32.totalorder %s129, 0
    %s132 = sadd.s32 %s131, 1
    %s133 = scalar_select %p130, %s131, %s132
    %p136 = pneg %p130
    %p137 = scmp.eq.s32.totalorder %s11, 1
    %p138 = por %p136, %p137
    %p139 = scmp.ne.s32.totalorder %s131, %s134
    %p140 = scmp.eq.s32.totalorder %s11, 0
    %p141 = por %p139, %p140
    %p142 = scmp.ne.s32.totalorder %s131, %s134
    %p143 = scmp.eq.s32.totalorder %s16, 1
    %p144 = por %p142, %p143
    %p145 = scmp.ne.s32.totalorder %s134, %s135
    %p146 = scmp.eq.s32.totalorder %s16, 0
    %p147 = por %p145, %p146
    %p148 = scmp.ne.s32.totalorder %s134, %s135
    %p149 = scmp.eq.s32.totalorder %s17, 1
    %p150 = por %p148, %p149
    %p152 = scmp.ne.s32.totalorder %s135, %s151
    %p153 = scmp.eq.s32.totalorder %s17, 0
    %p154 = por %p152, %p153
    %p155 = scmp.le.s32.totalorder 1, %s11
    %p156 = scmp.lt.s32.totalorder %s11, 3
    %p157 = pnand %p155, %p156
    %p158 = pneg %p157
    // Predicated region
    $region9: #{dwc_patch_embed.1} parent=5 // pred_check
      _
    $region10: #{dwc_patch_embed.1} parent=5 // pred_check_branch
      %160 = sbr.rel (%p157) target = $region12
    $region11: #{dwc_patch_embed.1} parent=5 // pred_region
      %s161 = ssub.s32 %s11, 1
      // Predicated region
      $region13: #{dwc_patch_embed.1} parent=11 // pred_check
        %p162 = pneg %p58
      $region14: #{dwc_patch_embed.1} parent=11 // pred_check_branch
        %164 = sbr.rel (%p162) target = $region16
      $region15: #{dwc_patch_embed.1} parent=11 // pred_region
        _
      $region16: #{dwc_patch_embed.1} parent=11 // pred_fallthru
        _
      // Predicated region
      $region17: #{dwc_patch_embed.1} parent=11 // pred_check
        %p165 = pneg %p79
      $region18: #{dwc_patch_embed.1} parent=11 // pred_check_branch
        %167 = sbr.rel (%p165) target = $region20
      $region19: #{dwc_patch_embed.1} parent=11 // pred_region
        _
      $region20: #{dwc_patch_embed.1} parent=11 // pred_fallthru
        _
      // Predicated region
      $region21: #{dwc_patch_embed.1} parent=11 // pred_check
        %p168 = pneg %p100
      $region22: #{dwc_patch_embed.1} parent=11 // pred_check_branch
        %170 = sbr.rel (%p168) target = $region24
      $region23: #{dwc_patch_embed.1} parent=11 // pred_region
        _
      $region24: #{dwc_patch_embed.1} parent=11 // pred_fallthru
        _
      // Predicated region
      $region25: #{dwc_patch_embed.1} parent=11 // pred_check
        %p171 = pneg %p121
      $region26: #{dwc_patch_embed.1} parent=11 // pred_check_branch
        %173 = sbr.rel (%p171) target = $region28
      $region27: #{dwc_patch_embed.1} parent=11 // pred_region
        _
      $region28: #{dwc_patch_embed.1} parent=11 // pred_fallthru
        _
    $region12: #{dwc_patch_embed.1} parent=5 // pred_fallthru
      _
    %p174 = scmp.lt.s32.totalorder %s11, 2
    // Predicated region
    $region29: #{dwc_patch_embed.1} parent=5 // pred_check
      %p175 = pneg %p174
    $region30: #{dwc_patch_embed.1} parent=5 // pred_check_branch
      %177 = sbr.rel (%p175) target = $region32
    $region31: #{dwc_patch_embed.1} parent=5 // pred_region
      // Predicated region
      $region33: #{dwc_patch_embed.1} parent=31 // pred_check
        %p178 = pneg %p31
      $region34: #{dwc_patch_embed.1} parent=31 // pred_check_branch
        %180 = sbr.rel (%p178) target = $region36
      $region35: #{dwc_patch_embed.1} parent=31 // pred_region
        %p181 = scmp.lt.s32.totalorder %s11, 1
        %s182 = scalar_select %p181, %s11, 1
        %s183 = smul.addr %s182, 8
        %s184 = smul.addr %s183, 8
        %s185 = scalar_lea.vmem %s0, %s184
      $region36: #{dwc_patch_embed.1} parent=31 // pred_fallthru
        _
    $region32: #{dwc_patch_embed.1} parent=5 // pred_fallthru
      _
    %p186 = scmp.le.s32.totalorder 1, %s11
    %p187 = scmp.lt.s32.totalorder %s11, 3
    %p188 = pnand %p186, %p187
    %p189 = pneg %p188
    // Predicated region
    $region37: #{dwc_patch_embed.1} parent=5 // pred_check
      _
    $region38: #{dwc_patch_embed.1} parent=5 // pred_check_branch
      %191 = sbr.rel (%p188) target = $region40
    $region39: #{dwc_patch_embed.1} parent=5 // pred_region
      %s192 = ssub.s32 %s11, 1
      %p193 = scmp.lt.s32.totalorder %s16, 1
      %s194 = scalar_select %p193, %s16, 1
      %s195 = smul.addr %s194, 8
      %s196 = smul.addr %s195, 8
      %s197 = scalar_lea.vmem %s0, %s196
      %p198 = pneg %p37
      %p199 = pneg %p34
      %p200 = pneg %p58
      %p201 = pneg %p55
      %p202 = pneg %p79
      %p203 = pneg %p76
      %p204 = pneg %p100
      %p205 = pneg %p97
      %p206 = pneg %p121
      %p207 = pneg %p118
      %p208 = pneg %p147
      %p209 = pneg %p144
      %p210 = scmp.lt.s32.totalorder %s16, 1
      %s211 = scalar_select %p210, %s16, 1
      %s212 = smul.addr %s211, 8
      %s213 = smul.addr %s212, 8
      %s214 = scalar_lea.vmem %s5, %s213
      %p215 = scmp.lt.s32.totalorder %s16, 1
      %s216 = scalar_select %p215, %s16, 1
      %s217 = smul.addr %s216, 8
      %s218 = smul.addr %s217, 8
      %s219 = scalar_lea.vmem %s0, %s218
      %p220 = scmp.lt.s32.totalorder %s16, 1
      %s221 = scalar_select %p220, %s16, 1
      %s222 = smul.addr %s221, 8
      %s223 = smul.addr %s222, 8
      %s224 = scalar_lea.vmem %s5, %s223
      %vm226 = vcmask 138240
      %227 = vst.msk [vmem:[#allocation2] sm:$0xff] %vm226, 0.0
      %228 = vst.msk [vmem:[#allocation2 + $0x18] sm:$0xff] %vm226, 0.0
      %229 = vst.msk [vmem:[#allocation2 + $0x30] sm:$0xff] %vm226, 0.0
      %230 = vst.msk [vmem:[#allocation2 + $0x48] sm:$0xff] %vm226, 0.0
      %vm231 = vcmask 277640
      %232 = vst.msk [vmem:[#allocation2 + $0x10] sm:$0xff] %vm231, 0.0
      %233 = vst.msk [vmem:[#allocation2 + $0x28] sm:$0xff] %vm231, 0.0
      %234 = vst.msk [vmem:[#allocation2 + $0x40] sm:$0xff] %vm231, 0.0
      %235 = vst.msk [vmem:[#allocation2 + $0x58] sm:$0xff] %vm231, 0.0
      %v236 = vld [vmem:[%s219] sm:$0xff]
      %v237 = vld [vmem:[%s219 + $0x8] sm:$0xff]
      %v238 = vld [vmem:[%s219 + $0x10] sm:$0xff]
      %v239 = vld [vmem:[%s219 + $0x18] sm:$0xff]
      %v240 = vld [vmem:[%s219 + $0x20] sm:$0xff]
      %v241 = vld [vmem:[%s219 + $0x28] sm:$0xff]
      %v242 = vld [vmem:[%s219 + $0x30] sm:$0xff]
      %v243 = vld [vmem:[%s219 + $0x38] sm:$0xff]
      %252 = vrot.lane.b32.xlu0 %v236, 17
      %v253 = vpop.permute.xlu0 %252
      %254 = vrot.lane.b32.xlu0 %v237, 17
      %v255 = vpop.permute.xlu0 %254
      %256 = vrot.lane.b32.xlu0 %v238, 17
      %v257 = vpop.permute.xlu0 %256
      %258 = vrot.lane.b32.xlu0 %v239, 17
      %v259 = vpop.permute.xlu0 %258
      %260 = vrot.lane.b32.xlu0 %v240, 17
      %v261 = vpop.permute.xlu0 %260
      %262 = vrot.lane.b32.xlu0 %v241, 17
      %v263 = vpop.permute.xlu0 %262
      %264 = vrot.lane.b32.xlu0 %v242, 17
      %v265 = vpop.permute.xlu0 %264
      %266 = vrot.lane.b32.xlu0 %v243, 17
      %v267 = vpop.permute.xlu0 %266
      %v268 = vsel %vm226, %v253, %v255
      %v269 = vsel %vm226, %v257, %v259
      %v270 = vsel %vm226, %v261, %v263
      %v271 = vsel %vm226, %v265, %v267
      %vm284 = vcmask 1047688
      %285 = vst.msk [vmem:[#allocation2] sm:$0xff] %vm284, %v253
      %286 = vst [vmem:[#allocation2 + $0x8] sm:$0xff] %v268
      %287 = vst.msk [vmem:[#allocation2 + $0x10] sm:$0xff] %vm226, %v255
      %288 = vst.msk [vmem:[#allocation2 + $0x18] sm:$0xff] %vm284, %v257
      %289 = vst [vmem:[#allocation2 + $0x20] sm:$0xff] %v269
      %290 = vst.msk [vmem:[#allocation2 + $0x28] sm:$0xff] %vm226, %v259
      %291 = vst.msk [vmem:[#allocation2 + $0x30] sm:$0xff] %vm284, %v261
      %292 = vst [vmem:[#allocation2 + $0x38] sm:$0xff] %v270
      %293 = vst.msk [vmem:[#allocation2 + $0x40] sm:$0xff] %vm226, %v263
      %294 = vst.msk [vmem:[#allocation2 + $0x48] sm:$0xff] %vm284, %v265
      %295 = vst [vmem:[#allocation2 + $0x50] sm:$0xff] %v271
      %296 = vst.msk [vmem:[#allocation2 + $0x58] sm:$0xff] %vm226, %v267
      %v297 = vld [vmem:[#allocation2] sm:$0xff]
      %v298 = vld [vmem:[#allocation2 + $0x8] sm:$0xff]
      %v299 = vld [vmem:[#allocation2 + $0x18] sm:$0xff]
      %v300 = vld [vmem:[#allocation2 + $0x20] sm:$0xff]
      %v301 = vld [vmem:[#allocation2 + $0x30] sm:$0xff]
      %v302 = vld [vmem:[#allocation2 + $0x38] sm:$0xff]
      %v303 = vld [vmem:[#allocation2 + $0x48] sm:$0xff]
      %v304 = vld [vmem:[#allocation2 + $0x50] sm:$0xff]
      %v305 = vld [vmem:[%s1] sm:$0xff]
      %v306 = vld [vmem:[%s1 + $0x8] sm:$0xff]
      %v307 = vld [vmem:[%s1 + $0x10] sm:$0xff]
      %v308 = vld [vmem:[%s1 + $0x18] sm:$0xff]
      %310 = vset.pattern.permute.xlu0 0
      %311 = vperm.xlu0 %310, %v305
      %v312 = vpop.permute.xlu0 %311
      %315 = vset.pattern.permute.xlu0 0
      %316 = vperm.xlu0 %315, %v306
      %v317 = vpop.permute.xlu0 %316
      %320 = vset.pattern.permute.xlu0 0
      %321 = vperm.xlu0 %320, %v307
      %v322 = vpop.permute.xlu0 %321
      %325 = vset.pattern.permute.xlu0 0
      %326 = vperm.xlu0 %325, %v308
      %v327 = vpop.permute.xlu0 %326
      %v329 = vmul.f32 %v297, %v312
      %v330 = vmul.f32 %v298, %v312
      %v331 = vmul.f32 %v299, %v317
      %v332 = vmul.f32 %v300, %v317
      %v333 = vmul.f32 %v301, %v322
      %v334 = vmul.f32 %v302, %v322
      %v335 = vmul.f32 %v303, %v327
      %v336 = vmul.f32 %v304, %v327
      %v337 = vld [vmem:[#allocation2] sm:$0xff]
      %v338 = vld [vmem:[#allocation2 + $0x8] sm:$0xff]
      %v339 = vld [vmem:[#allocation2 + $0x10] sm:$0xff]
      %v340 = vld [vmem:[#allocation2 + $0x18] sm:$0xff]
      %v341 = vld [vmem:[#allocation2 + $0x20] sm:$0xff]
      %v342 = vld [vmem:[#allocation2 + $0x28] sm:$0xff]
      %v343 = vld [vmem:[#allocation2 + $0x30] sm:$0xff]
      %v344 = vld [vmem:[#allocation2 + $0x38] sm:$0xff]
      %v345 = vld [vmem:[#allocation2 + $0x40] sm:$0xff]
      %v346 = vld [vmem:[#allocation2 + $0x48] sm:$0xff]
      %v347 = vld [vmem:[#allocation2 + $0x50] sm:$0xff]
      %v348 = vld [vmem:[#allocation2 + $0x58] sm:$0xff]
      %349 = vset.pattern.permute.xlu0 3
      %350 = vperm.xlu0 %349, %v305
      %v351 = vpop.permute.xlu0 %350
      %353 = vset.pattern.permute.xlu0 3
      %354 = vperm.xlu0 %353, %v306
      %v355 = vpop.permute.xlu0 %354
      %357 = vset.pattern.permute.xlu0 3
      %358 = vperm.xlu0 %357, %v307
      %v359 = vpop.permute.xlu0 %358
      %361 = vset.pattern.permute.xlu0 3
      %362 = vperm.xlu0 %361, %v308
      %v363 = vpop.permute.xlu0 %362
      %v365 = vmul.f32 %v337, %v351
      %v366 = vmul.f32 %v338, %v351
      %v367 = vmul.f32 %v339, %v351
      %v368 = vmul.f32 %v340, %v355
      %v369 = vmul.f32 %v341, %v355
      %v370 = vmul.f32 %v342, %v355
      %v371 = vmul.f32 %v343, %v359
      %v372 = vmul.f32 %v344, %v359
      %v373 = vmul.f32 %v345, %v359
      %v374 = vmul.f32 %v346, %v363
      %v375 = vmul.f32 %v347, %v363
      %v376 = vmul.f32 %v348, %v363
      %389 = vrot.lane.b32.xlu0 %v365, 112
      %v390 = vpop.permute.xlu0 %389
      %391 = vrot.lane.b32.xlu0 %v366, 112
      %v392 = vpop.permute.xlu0 %391
      %393 = vrot.lane.b32.xlu0 %v367, 112
      %v394 = vpop.permute.xlu0 %393
      %395 = vrot.lane.b32.xlu0 %v368, 112
      %v396 = vpop.permute.xlu0 %395
      %397 = vrot.lane.b32.xlu0 %v369, 112
      %v398 = vpop.permute.xlu0 %397
      %399 = vrot.lane.b32.xlu0 %v370, 112
      %v400 = vpop.permute.xlu0 %399
      %401 = vrot.lane.b32.xlu0 %v371, 112
      %v402 = vpop.permute.xlu0 %401
      %403 = vrot.lane.b32.xlu0 %v372, 112
      %v404 = vpop.permute.xlu0 %403
      %405 = vrot.lane.b32.xlu0 %v373, 112
      %v406 = vpop.permute.xlu0 %405
      %407 = vrot.lane.b32.xlu0 %v374, 112
      %v408 = vpop.permute.xlu0 %407
      %409 = vrot.lane.b32.xlu0 %v375, 112
      %v410 = vpop.permute.xlu0 %409
      %411 = vrot.lane.b32.xlu0 %v376, 112
      %v412 = vpop.permute.xlu0 %411
      %vm413 = vcmask 916480
      %v414 = vsel %vm413, %v390, %v392
      %v415 = vsel %vm413, %v392, %v394
      %v416 = vsel %vm413, %v396, %v398
      %v417 = vsel %vm413, %v398, %v400
      %v418 = vsel %vm413, %v402, %v404
      %v419 = vsel %vm413, %v404, %v406
      %v420 = vsel %vm413, %v408, %v410
      %v421 = vsel %vm413, %v410, %v412
      %v430 = vadd.f32 %v329, %v414
      %v431 = vadd.f32 %v330, %v415
      %v432 = vadd.f32 %v331, %v416
      %v433 = vadd.f32 %v332, %v417
      %v434 = vadd.f32 %v333, %v418
      %v435 = vadd.f32 %v334, %v419
      %v436 = vadd.f32 %v335, %v420
      %v437 = vadd.f32 %v336, %v421
      %438 = vset.pattern.permute.xlu0 6
      %439 = vperm.xlu0 %438, %v305
      %v440 = vpop.permute.xlu0 %439
      %442 = vset.pattern.permute.xlu0 6
      %443 = vperm.xlu0 %442, %v306
      %v444 = vpop.permute.xlu0 %443
      %446 = vset.pattern.permute.xlu0 6
      %447 = vperm.xlu0 %446, %v307
      %v448 = vpop.permute.xlu0 %447
      %450 = vset.pattern.permute.xlu0 6
      %451 = vperm.xlu0 %450, %v308
      %v452 = vpop.permute.xlu0 %451
      %v454 = vmul.f32 %v337, %v440
      %v455 = vmul.f32 %v338, %v440
      %v456 = vmul.f32 %v339, %v440
      %v457 = vmul.f32 %v340, %v444
      %v458 = vmul.f32 %v341, %v444
      %v459 = vmul.f32 %v342, %v444
      %v460 = vmul.f32 %v343, %v448
      %v461 = vmul.f32 %v344, %v448
      %v462 = vmul.f32 %v345, %v448
      %v463 = vmul.f32 %v346, %v452
      %v464 = vmul.f32 %v347, %v452
      %v465 = vmul.f32 %v348, %v452
      %478 = vrot.lane.b32.xlu0 %v454, 96
      %v479 = vpop.permute.xlu0 %478
      %480 = vrot.lane.b32.xlu0 %v455, 96
      %v481 = vpop.permute.xlu0 %480
      %482 = vrot.lane.b32.xlu0 %v456, 96
      %v483 = vpop.permute.xlu0 %482
      %484 = vrot.lane.b32.xlu0 %v457, 96
      %v485 = vpop.permute.xlu0 %484
      %486 = vrot.lane.b32.xlu0 %v458, 96
      %v487 = vpop.permute.xlu0 %486
      %488 = vrot.lane.b32.xlu0 %v459, 96
      %v489 = vpop.permute.xlu0 %488
      %490 = vrot.lane.b32.xlu0 %v460, 96
      %v491 = vpop.permute.xlu0 %490
      %492 = vrot.lane.b32.xlu0 %v461, 96
      %v493 = vpop.permute.xlu0 %492
      %494 = vrot.lane.b32.xlu0 %v462, 96
      %v495 = vpop.permute.xlu0 %494
      %496 = vrot.lane.b32.xlu0 %v463, 96
      %v497 = vpop.permute.xlu0 %496
      %498 = vrot.lane.b32.xlu0 %v464, 96
      %v499 = vpop.permute.xlu0 %498
      %500 = vrot.lane.b32.xlu0 %v465, 96
      %v501 = vpop.permute.xlu0 %500
      %vm502 = vcmask 785408
      %v503 = vsel %vm502, %v479, %v481
      %v504 = vsel %vm502, %v481, %v483
      %v505 = vsel %vm502, %v485, %v487
      %v506 = vsel %vm502, %v487, %v489
      %v507 = vsel %vm502, %v491, %v493
      %v508 = vsel %vm502, %v493, %v495
      %v509 = vsel %vm502, %v497, %v499
      %v510 = vsel %vm502, %v499, %v501
      %v519 = vadd.f32 %v430, %v503
      %v520 = vadd.f32 %v431, %v504
      %v521 = vadd.f32 %v432, %v505
      %v522 = vadd.f32 %v433, %v506
      %v523 = vadd.f32 %v434, %v507
      %v524 = vadd.f32 %v435, %v508
      %v525 = vadd.f32 %v436, %v509
      %v526 = vadd.f32 %v437, %v510
      %v527 = vld [vmem:[%s2] sm:$0x3]
      %v529 = vlaneseq
      %v530 = vshrl.u32 %v529, 7
      %v531 = vsub.s32 0, %v530
      %v532 = vrot.slane %v527, %v531
      %v533 = vlaneseq
      %v534 = vshrl.u32 %v533, 7
      %v535 = vsub.s32 1, %v534
      %v536 = vrot.slane %v527, %v535
      %v539 = vmul.f32 %v519, %v532
      %v540 = vmul.f32 %v520, %v536
      %v541 = vmul.f32 %v521, %v532
      %v542 = vmul.f32 %v522, %v536
      %v543 = vmul.f32 %v523, %v532
      %v544 = vmul.f32 %v524, %v536
      %v545 = vmul.f32 %v525, %v532
      %v546 = vmul.f32 %v526, %v536
      %547 = vset.pattern.permute.xlu0 1
      %548 = vperm.xlu0 %547, %v305
      %v549 = vpop.permute.xlu0 %548
      %551 = vset.pattern.permute.xlu0 1
      %552 = vperm.xlu0 %551, %v306
      %v553 = vpop.permute.xlu0 %552
      %555 = vset.pattern.permute.xlu0 1
      %556 = vperm.xlu0 %555, %v307
      %v557 = vpop.permute.xlu0 %556
      %559 = vset.pattern.permute.xlu0 1
      %560 = vperm.xlu0 %559, %v308
      %v561 = vpop.permute.xlu0 %560
      %v563 = vmul.f32 %v337, %v549
      %v564 = vmul.f32 %v338, %v549
      %v565 = vmul.f32 %v339, %v549
      %v566 = vmul.f32 %v340, %v553
      %v567 = vmul.f32 %v341, %v553
      %v568 = vmul.f32 %v342, %v553
      %v569 = vmul.f32 %v343, %v557
      %v570 = vmul.f32 %v344, %v557
      %v571 = vmul.f32 %v345, %v557
      %v572 = vmul.f32 %v346, %v561
      %v573 = vmul.f32 %v347, %v561
      %v574 = vmul.f32 %v348, %v561
      %575 = vset.pattern.permute.xlu0 4
      %576 = vperm.xlu0 %575, %v305
      %v577 = vpop.permute.xlu0 %576
      %579 = vset.pattern.permute.xlu0 4
      %580 = vperm.xlu0 %579, %v306
      %v581 = vpop.permute.xlu0 %580
      %583 = vset.pattern.permute.xlu0 4
      %584 = vperm.xlu0 %583, %v307
      %v585 = vpop.permute.xlu0 %584
      %587 = vset.pattern.permute.xlu0 4
      %588 = vperm.xlu0 %587, %v308
      %v589 = vpop.permute.xlu0 %588
      %v591 = vmul.f32 %v337, %v577
      %v592 = vmul.f32 %v338, %v577
      %v593 = vmul.f32 %v339, %v577
      %v594 = vmul.f32 %v340, %v581
      %v595 = vmul.f32 %v341, %v581
      %v596 = vmul.f32 %v342, %v581
      %v597 = vmul.f32 %v343, %v585
      %v598 = vmul.f32 %v344, %v585
      %v599 = vmul.f32 %v345, %v585
      %v600 = vmul.f32 %v346, %v589
      %v601 = vmul.f32 %v347, %v589
      %v602 = vmul.f32 %v348, %v589
      %615 = vrot.lane.b32.xlu0 %v591, 112
      %v616 = vpop.permute.xlu0 %615
      %617 = vrot.lane.b32.xlu0 %v592, 112
      %v618 = vpop.permute.xlu0 %617
      %619 = vrot.lane.b32.xlu0 %v593, 112
      %v620 = vpop.permute.xlu0 %619
      %621 = vrot.lane.b32.xlu0 %v594, 112
      %v622 = vpop.permute.xlu0 %621
      %623 = vrot.lane.b32.xlu0 %v595, 112
      %v624 = vpop.permute.xlu0 %623
      %625 = vrot.lane.b32.xlu0 %v596, 112
      %v626 = vpop.permute.xlu0 %625
      %627 = vrot.lane.b32.xlu0 %v597, 112
      %v628 = vpop.permute.xlu0 %627
      %629 = vrot.lane.b32.xlu0 %v598, 112
      %v630 = vpop.permute.xlu0 %629
      %631 = vrot.lane.b32.xlu0 %v599, 112
      %v632 = vpop.permute.xlu0 %631
      %633 = vrot.lane.b32.xlu0 %v600, 112
      %v634 = vpop.permute.xlu0 %633
      %635 = vrot.lane.b32.xlu0 %v601, 112
      %v636 = vpop.permute.xlu0 %635
      %637 = vrot.lane.b32.xlu0 %v602, 112
      %v638 = vpop.permute.xlu0 %637
      %v639 = vsel %vm413, %v616, %v618
      %v640 = vsel %vm413, %v618, %v620
      %v641 = vsel %vm413, %v622, %v624
      %v642 = vsel %vm413, %v624, %v626
      %v643 = vsel %vm413, %v628, %v630
      %v644 = vsel %vm413, %v630, %v632
      %v645 = vsel %vm413, %v634, %v636
      %v646 = vsel %vm413, %v636, %v638
      %v659 = vadd.f32 %v563, %v639
      %v660 = vadd.f32 %v564, %v640
      %v661 = vadd.f32 %v565, %v620
      %v662 = vadd.f32 %v566, %v641
      %v663 = vadd.f32 %v567, %v642
      %v664 = vadd.f32 %v568, %v626
      %v665 = vadd.f32 %v569, %v643
      %v666 = vadd.f32 %v570, %v644
      %v667 = vadd.f32 %v571, %v632
      %v668 = vadd.f32 %v572, %v645
      %v669 = vadd.f32 %v573, %v646
      %v670 = vadd.f32 %v574, %v638
      %671 = vset.pattern.permute.xlu0 7
      %672 = vperm.xlu0 %671, %v305
      %v673 = vpop.permute.xlu0 %672
      %675 = vset.pattern.permute.xlu0 7
      %676 = vperm.xlu0 %675, %v306
      %v677 = vpop.permute.xlu0 %676
      %679 = vset.pattern.permute.xlu0 7
      %680 = vperm.xlu0 %679, %v307
      %v681 = vpop.permute.xlu0 %680
      %683 = vset.pattern.permute.xlu0 7
      %684 = vperm.xlu0 %683, %v308
      %v685 = vpop.permute.xlu0 %684
      %v687 = vmul.f32 %v337, %v673
      %v688 = vmul.f32 %v338, %v673
      %v689 = vmul.f32 %v339, %v673
      %v690 = vmul.f32 %v340, %v677
      %v691 = vmul.f32 %v341, %v677
      %v692 = vmul.f32 %v342, %v677
      %v693 = vmul.f32 %v343, %v681
      %v694 = vmul.f32 %v344, %v681
      %v695 = vmul.f32 %v345, %v681
      %v696 = vmul.f32 %v346, %v685
      %v697 = vmul.f32 %v347, %v685
      %v698 = vmul.f32 %v348, %v685
      %711 = vrot.lane.b32.xlu0 %v687, 96
      %v712 = vpop.permute.xlu0 %711
      %713 = vrot.lane.b32.xlu0 %v688, 96
      %v714 = vpop.permute.xlu0 %713
      %715 = vrot.lane.b32.xlu0 %v689, 96
      %v716 = vpop.permute.xlu0 %715
      %717 = vrot.lane.b32.xlu0 %v690, 96
      %v718 = vpop.permute.xlu0 %717
      %719 = vrot.lane.b32.xlu0 %v691, 96
      %v720 = vpop.permute.xlu0 %719
      %721 = vrot.lane.b32.xlu0 %v692, 96
      %v722 = vpop.permute.xlu0 %721
      %723 = vrot.lane.b32.xlu0 %v693, 96
      %v724 = vpop.permute.xlu0 %723
      %725 = vrot.lane.b32.xlu0 %v694, 96
      %v726 = vpop.permute.xlu0 %725
      %727 = vrot.lane.b32.xlu0 %v695, 96
      %v728 = vpop.permute.xlu0 %727
      %729 = vrot.lane.b32.xlu0 %v696, 96
      %v730 = vpop.permute.xlu0 %729
      %731 = vrot.lane.b32.xlu0 %v697, 96
      %v732 = vpop.permute.xlu0 %731
      %733 = vrot.lane.b32.xlu0 %v698, 96
      %v734 = vpop.permute.xlu0 %733
      %v735 = vsel %vm502, %v712, %v714
      %v736 = vsel %vm502, %v714, %v716
      %v737 = vsel %vm502, %v718, %v720
      %v738 = vsel %vm502, %v720, %v722
      %v739 = vsel %vm502, %v724, %v726
      %v740 = vsel %vm502, %v726, %v728
      %v741 = vsel %vm502, %v730, %v732
      %v742 = vsel %vm502, %v732, %v734
      %v755 = vadd.f32 %v659, %v735
      %v756 = vadd.f32 %v660, %v736
      %v757 = vadd.f32 %v661, %v716
      %v758 = vadd.f32 %v662, %v737
      %v759 = vadd.f32 %v663, %v738
      %v760 = vadd.f32 %v664, %v722
      %v761 = vadd.f32 %v665, %v739
      %v762 = vadd.f32 %v666, %v740
      %v763 = vadd.f32 %v667, %v728
      %v764 = vadd.f32 %v668, %v741
      %v765 = vadd.f32 %v669, %v742
      %v766 = vadd.f32 %v670, %v734
      %779 = vrot.lane.b32.xlu0 %v755, 127
      %v780 = vpop.permute.xlu0 %779
      %781 = vrot.lane.b32.xlu0 %v756, 127
      %v782 = vpop.permute.xlu0 %781
      %783 = vrot.lane.b32.xlu0 %v757, 127
      %v784 = vpop.permute.xlu0 %783
      %785 = vrot.lane.b32.xlu0 %v758, 127
      %v786 = vpop.permute.xlu0 %785
      %787 = vrot.lane.b32.xlu0 %v759, 127
      %v788 = vpop.permute.xlu0 %787
      %789 = vrot.lane.b32.xlu0 %v760, 127
      %v790 = vpop.permute.xlu0 %789
      %791 = vrot.lane.b32.xlu0 %v761, 127
      %v792 = vpop.permute.xlu0 %791
      %793 = vrot.lane.b32.xlu0 %v762, 127
      %v794 = vpop.permute.xlu0 %793
      %795 = vrot.lane.b32.xlu0 %v763, 127
      %v796 = vpop.permute.xlu0 %795
      %797 = vrot.lane.b32.xlu0 %v764, 127
      %v798 = vpop.permute.xlu0 %797
      %799 = vrot.lane.b32.xlu0 %v765, 127
      %v800 = vpop.permute.xlu0 %799
      %801 = vrot.lane.b32.xlu0 %v766, 127
      %v802 = vpop.permute.xlu0 %801
      %vm803 = vcmask 1039360
      %v804 = vsel %vm803, %v780, %v782
      %v805 = vsel %vm803, %v782, %v784
      %v806 = vsel %vm803, %v786, %v788
      %v807 = vsel %vm803, %v788, %v790
      %v808 = vsel %vm803, %v792, %v794
      %v809 = vsel %vm803, %v794, %v796
      %v810 = vsel %vm803, %v798, %v800
      %v811 = vsel %vm803, %v800, %v802
      %v820 = vadd.f32 %v539, %v804
      %v821 = vadd.f32 %v540, %v805
      %v822 = vadd.f32 %v541, %v806
      %v823 = vadd.f32 %v542, %v807
      %v824 = vadd.f32 %v543, %v808
      %v825 = vadd.f32 %v544, %v809
      %v826 = vadd.f32 %v545, %v810
      %v827 = vadd.f32 %v546, %v811
      %828 = vset.pattern.permute.xlu0 2
      %829 = vperm.xlu0 %828, %v305
      %v830 = vpop.permute.xlu0 %829
      %832 = vset.pattern.permute.xlu0 2
      %833 = vperm.xlu0 %832, %v306
      %v834 = vpop.permute.xlu0 %833
      %836 = vset.pattern.permute.xlu0 2
      %837 = vperm.xlu0 %836, %v307
      %v838 = vpop.permute.xlu0 %837
      %840 = vset.pattern.permute.xlu0 2
      %841 = vperm.xlu0 %840, %v308
      %v842 = vpop.permute.xlu0 %841
      %v844 = vmul.f32 %v337, %v830
      %v845 = vmul.f32 %v338, %v830
      %v846 = vmul.f32 %v339, %v830
      %v847 = vmul.f32 %v340, %v834
      %v848 = vmul.f32 %v341, %v834
      %v849 = vmul.f32 %v342, %v834
      %v850 = vmul.f32 %v343, %v838
      %v851 = vmul.f32 %v344, %v838
      %v852 = vmul.f32 %v345, %v838
      %v853 = vmul.f32 %v346, %v842
      %v854 = vmul.f32 %v347, %v842
      %v855 = vmul.f32 %v348, %v842
      %856 = vset.pattern.permute.xlu0 5
      %857 = vperm.xlu0 %856, %v305
      %v858 = vpop.permute.xlu0 %857
      %860 = vset.pattern.permute.xlu0 5
      %861 = vperm.xlu0 %860, %v306
      %v862 = vpop.permute.xlu0 %861
      %864 = vset.pattern.permute.xlu0 5
      %865 = vperm.xlu0 %864, %v307
      %v866 = vpop.permute.xlu0 %865
      %868 = vset.pattern.permute.xlu0 5
      %869 = vperm.xlu0 %868, %v308
      %v870 = vpop.permute.xlu0 %869
      %v872 = vmul.f32 %v337, %v858
      %v873 = vmul.f32 %v338, %v858
      %v874 = vmul.f32 %v339, %v858
      %v875 = vmul.f32 %v340, %v862
      %v876 = vmul.f32 %v341, %v862
      %v877 = vmul.f32 %v342, %v862
      %v878 = vmul.f32 %v343, %v866
      %v879 = vmul.f32 %v344, %v866
      %v880 = vmul.f32 %v345, %v866
      %v881 = vmul.f32 %v346, %v870
      %v882 = vmul.f32 %v347, %v870
      %v883 = vmul.f32 %v348, %v870
      %896 = vrot.lane.b32.xlu0 %v872, 112
      %v897 = vpop.permute.xlu0 %896
      %898 = vrot.lane.b32.xlu0 %v873, 112
      %v899 = vpop.permute.xlu0 %898
      %900 = vrot.lane.b32.xlu0 %v874, 112
      %v901 = vpop.permute.xlu0 %900
      %902 = vrot.lane.b32.xlu0 %v875, 112
      %v903 = vpop.permute.xlu0 %902
      %904 = vrot.lane.b32.xlu0 %v876, 112
      %v905 = vpop.permute.xlu0 %904
      %906 = vrot.lane.b32.xlu0 %v877, 112
      %v907 = vpop.permute.xlu0 %906
      %908 = vrot.lane.b32.xlu0 %v878, 112
      %v909 = vpop.permute.xlu0 %908
      %910 = vrot.lane.b32.xlu0 %v879, 112
      %v911 = vpop.permute.xlu0 %910
      %912 = vrot.lane.b32.xlu0 %v880, 112
      %v913 = vpop.permute.xlu0 %912
      %914 = vrot.lane.b32.xlu0 %v881, 112
      %v915 = vpop.permute.xlu0 %914
      %916 = vrot.lane.b32.xlu0 %v882, 112
      %v917 = vpop.permute.xlu0 %916
      %918 = vrot.lane.b32.xlu0 %v883, 112
      %v919 = vpop.permute.xlu0 %918
      %v920 = vsel %vm413, %v897, %v899
      %v921 = vsel %vm413, %v899, %v901
      %v922 = vsel %vm413, %v903, %v905
      %v923 = vsel %vm413, %v905, %v907
      %v924 = vsel %vm413, %v909, %v911
      %v925 = vsel %vm413, %v911, %v913
      %v926 = vsel %vm413, %v915, %v917
      %v927 = vsel %vm413, %v917, %v919
      %v940 = vadd.f32 %v844, %v920
      %v941 = vadd.f32 %v845, %v921
      %v942 = vadd.f32 %v846, %v901
      %v943 = vadd.f32 %v847, %v922
      %v944 = vadd.f32 %v848, %v923
      %v945 = vadd.f32 %v849, %v907
      %v946 = vadd.f32 %v850, %v924
      %v947 = vadd.f32 %v851, %v925
      %v948 = vadd.f32 %v852, %v913
      %v949 = vadd.f32 %v853, %v926
      %v950 = vadd.f32 %v854, %v927
      %v951 = vadd.f32 %v855, %v919
      %952 = vset.pattern.permute.xlu0 8
      %953 = vperm.xlu0 %952, %v305
      %v954 = vpop.permute.xlu0 %953
      %956 = vset.pattern.permute.xlu0 8
      %957 = vperm.xlu0 %956, %v306
      %v958 = vpop.permute.xlu0 %957
      %960 = vset.pattern.permute.xlu0 8
      %961 = vperm.xlu0 %960, %v307
      %v962 = vpop.permute.xlu0 %961
      %964 = vset.pattern.permute.xlu0 8
      %965 = vperm.xlu0 %964, %v308
      %v966 = vpop.permute.xlu0 %965
      %v968 = vmul.f32 %v337, %v954
      %v969 = vmul.f32 %v338, %v954
      %v970 = vmul.f32 %v339, %v954
      %v971 = vmul.f32 %v340, %v958
      %v972 = vmul.f32 %v341, %v958
      %v973 = vmul.f32 %v342, %v958
      %v974 = vmul.f32 %v343, %v962
      %v975 = vmul.f32 %v344, %v962
      %v976 = vmul.f32 %v345, %v962
      %v977 = vmul.f32 %v346, %v966
      %v978 = vmul.f32 %v347, %v966
      %v979 = vmul.f32 %v348, %v966
      %992 = vrot.lane.b32.xlu0 %v968, 96
      %v993 = vpop.permute.xlu0 %992
      %994 = vrot.lane.b32.xlu0 %v969, 96
      %v995 = vpop.permute.xlu0 %994
      %996 = vrot.lane.b32.xlu0 %v970, 96
      %v997 = vpop.permute.xlu0 %996
      %998 = vrot.lane.b32.xlu0 %v971, 96
      %v999 = vpop.permute.xlu0 %998
      %1000 = vrot.lane.b32.xlu0 %v972, 96
      %v1001 = vpop.permute.xlu0 %1000
      %1002 = vrot.lane.b32.xlu0 %v973, 96
      %v1003 = vpop.permute.xlu0 %1002
      %1004 = vrot.lane.b32.xlu0 %v974, 96
      %v1005 = vpop.permute.xlu0 %1004
      %1006 = vrot.lane.b32.xlu0 %v975, 96
      %v1007 = vpop.permute.xlu0 %1006
      %1008 = vrot.lane.b32.xlu0 %v976, 96
      %v1009 = vpop.permute.xlu0 %1008
      %1010 = vrot.lane.b32.xlu0 %v977, 96
      %v1011 = vpop.permute.xlu0 %1010
      %1012 = vrot.lane.b32.xlu0 %v978, 96
      %v1013 = vpop.permute.xlu0 %1012
      %1014 = vrot.lane.b32.xlu0 %v979, 96
      %v1015 = vpop.permute.xlu0 %1014
      %v1016 = vsel %vm502, %v993, %v995
      %v1017 = vsel %vm502, %v995, %v997
      %v1018 = vsel %vm502, %v999, %v1001
      %v1019 = vsel %vm502, %v1001, %v1003
      %v1020 = vsel %vm502, %v1005, %v1007
      %v1021 = vsel %vm502, %v1007, %v1009
      %v1022 = vsel %vm502, %v1011, %v1013
      %v1023 = vsel %vm502, %v1013, %v1015
      %v1036 = vadd.f32 %v940, %v1016
      %v1037 = vadd.f32 %v941, %v1017
      %v1038 = vadd.f32 %v942, %v997
      %v1039 = vadd.f32 %v943, %v1018
      %v1040 = vadd.f32 %v944, %v1019
      %v1041 = vadd.f32 %v945, %v1003
      %v1042 = vadd.f32 %v946, %v1020
      %v1043 = vadd.f32 %v947, %v1021
      %v1044 = vadd.f32 %v948, %v1009
      %v1045 = vadd.f32 %v949, %v1022
      %v1046 = vadd.f32 %v950, %v1023
      %v1047 = vadd.f32 %v951, %v1015
      %s1048 = scalar_lea.vmem %s2, 4
      %v1049 = vld [vmem:[%s1048] sm:$0x3]
      %v1051 = vlaneseq
      %v1052 = vshrl.u32 %v1051, 7
      %v1053 = vsub.s32 0, %v1052
      %v1054 = vrot.slane %v1049, %v1053
      %v1055 = vlaneseq
      %v1056 = vshrl.u32 %v1055, 7
      %v1057 = vsub.s32 1, %v1056
      %v1058 = vrot.slane %v1049, %v1057
      %1059 = vrot.lane.b32.xlu0 %v1054, 2
      %v1060 = vpop.permute.xlu0 %1059
      %1061 = vrot.lane.b32.xlu0 %v1058, 2
      %v1062 = vpop.permute.xlu0 %1061
      %vm1063 = vcmask 15360
      %v1064 = vsel %vm1063, %v1060, %v1062
      %v1068 = vmul.f32 %v1036, %v1060
      %v1069 = vmul.f32 %v1037, %v1064
      %v1070 = vmul.f32 %v1038, %v1062
      %v1071 = vmul.f32 %v1039, %v1060
      %v1072 = vmul.f32 %v1040, %v1064
      %v1073 = vmul.f32 %v1041, %v1062
      %v1074 = vmul.f32 %v1042, %v1060
      %v1075 = vmul.f32 %v1043, %v1064
      %v1076 = vmul.f32 %v1044, %v1062
      %v1077 = vmul.f32 %v1045, %v1060
      %v1078 = vmul.f32 %v1046, %v1064
      %v1079 = vmul.f32 %v1047, %v1062
      %1092 = vrot.lane.b32.xlu0 %v1068, 126
      %v1093 = vpop.permute.xlu0 %1092
      %1094 = vrot.lane.b32.xlu0 %v1069, 126
      %v1095 = vpop.permute.xlu0 %1094
      %1096 = vrot.lane.b32.xlu0 %v1070, 126
      %v1097 = vpop.permute.xlu0 %1096
      %1098 = vrot.lane.b32.xlu0 %v1071, 126
      %v1099 = vpop.permute.xlu0 %1098
      %1100 = vrot.lane.b32.xlu0 %v1072, 126
      %v1101 = vpop.permute.xlu0 %1100
      %1102 = vrot.lane.b32.xlu0 %v1073, 126
      %v1103 = vpop.permute.xlu0 %1102
      %1104 = vrot.lane.b32.xlu0 %v1074, 126
      %v1105 = vpop.permute.xlu0 %1104
      %1106 = vrot.lane.b32.xlu0 %v1075, 126
      %v1107 = vpop.permute.xlu0 %1106
      %1108 = vrot.lane.b32.xlu0 %v1076, 126
      %v1109 = vpop.permute.xlu0 %1108
      %1110 = vrot.lane.b32.xlu0 %v1077, 126
      %v1111 = vpop.permute.xlu0 %1110
      %1112 = vrot.lane.b32.xlu0 %v1078, 126
      %v1113 = vpop.permute.xlu0 %1112
      %1114 = vrot.lane.b32.xlu0 %v1079, 126
      %v1115 = vpop.permute.xlu0 %1114
      %vm1116 = vcmask 1031168
      %v1117 = vsel %vm1116, %v1093, %v1095
      %v1118 = vsel %vm1116, %v1095, %v1097
      %v1119 = vsel %vm1116, %v1099, %v1101
      %v1120 = vsel %vm1116, %v1101, %v1103
      %v1121 = vsel %vm1116, %v1105, %v1107
      %v1122 = vsel %vm1116, %v1107, %v1109
      %v1123 = vsel %vm1116, %v1111, %v1113
      %v1124 = vsel %vm1116, %v1113, %v1115
      %v1133 = vadd.f32 %v820, %v1117
      %v1134 = vadd.f32 %v821, %v1118
      %v1135 = vadd.f32 %v822, %v1119
      %v1136 = vadd.f32 %v823, %v1120
      %v1137 = vadd.f32 %v824, %v1121
      %v1138 = vadd.f32 %v825, %v1122
      %v1139 = vadd.f32 %v826, %v1123
      %v1140 = vadd.f32 %v827, %v1124
      %v1141 = vpack.c.bf16 %v1135, %v1133
      %v1142 = vpack.c.bf16 %v1136, %v1134
      %v1143 = vpack.c.bf16 %v1139, %v1137
      %v1144 = vpack.c.bf16 %v1140, %v1138
      %v1145 = vld [vmem:[%s3] sm:$0xf]
      %v1146 = vld [vmem:[%s3 + $0x4] sm:$0xf]
      %v1147 = vld [vmem:[%s3 + $0x8] sm:$0xf]
      %v1148 = vld [vmem:[%s3 + $0xc] sm:$0xf]
      %v1149 = vld [vmem:[%s4] sm:$0xff]
      %v1150 = vld [vmem:[%s4 + $0x8] sm:$0xff]
      %v1151 = vld [vmem:[%s4 + $0x10] sm:$0xff]
      %v1152 = vld [vmem:[%s4 + $0x18] sm:$0xff]
      %1154 = vset.pattern.permute.xlu0 0
      %1155 = vperm.xlu0 %1154, %v1149
      %v1156 = vpop.permute.xlu0 %1155
      %1159 = vset.pattern.permute.xlu0 0
      %1160 = vperm.xlu0 %1159, %v1150
      %v1161 = vpop.permute.xlu0 %1160
      %1164 = vset.pattern.permute.xlu0 0
      %1165 = vperm.xlu0 %1164, %v1151
      %v1166 = vpop.permute.xlu0 %1165
      %1169 = vset.pattern.permute.xlu0 0
      %1170 = vperm.xlu0 %1169, %v1152
      %v1171 = vpop.permute.xlu0 %1170
      %v1177 = vunpack.c.l.b16 %v1145
      %v1178 = vunpack.c.l.b16 %v1146
      %v1179 = vunpack.c.l.b16 %v1147
      %v1180 = vunpack.c.l.b16 %v1148
      %v1181 = vpack.c.b16 %v1178, %v1177
      %v1182 = vpack.c.b16 %v1180, %v1179
      %vm1183 = vcmask 261120
      %v1185 = vsel %vm1183, %v1181, 0
      %v1188 = vsel %vm1183, %v1182, 0
      %1190 = vmatprep.subr.bf16.mxu0 %v1142
      %1191 = vmatpush1.bf16.msra.mxu0 %v1141
      %1192 = vmatprep.subr.bf16.mxu0 %v1144
      %1193 = vmatpush1.bf16.msra.mxu0 %v1143
      %1194 = vmatprep.subr.bf16.mxu0 0
      %1195 = vmatpush1.bf16.msra.mxu0 0
      %1196 = vmatprep.subr.bf16.mxu0 0
      %1197 = vmatpush1.bf16.msra.mxu0 0
      %1198 = vmatprep.subr.bf16.mxu0 0
      %1199 = vmatpush1.bf16.msra.mxu0 0
      %1200 = vmatprep.subr.bf16.mxu0 0
      %1201 = vmatpush1.bf16.msra.mxu0 0
      %1202 = vmatprep.subr.bf16.mxu0 0
      %1203 = vmatpush1.bf16.msra.mxu0 0
      %1204 = vmatprep.subr.bf16.mxu0 0
      %1205 = vmatpush1.bf16.msra.mxu0 0
      %1206 = vmatprep.subr.bf16.mxu0 0
      %1207 = vmatpush1.bf16.msra.mxu0 0
      %1208 = vmatprep.subr.bf16.mxu0 0
      %1209 = vmatpush1.bf16.msra.mxu0 0
      %1210 = vmatprep.subr.bf16.mxu0 0
      %1211 = vmatpush1.bf16.msra.mxu0 0
      %1212 = vmatprep.subr.bf16.mxu0 0
      %1213 = vmatpush1.bf16.msra.mxu0 0
      %1214 = vmatprep.subr.bf16.mxu0 0
      %1215 = vmatpush1.bf16.msra.mxu0 0
      %1216 = vmatprep.subr.bf16.mxu0 0
      %1217 = vmatpush1.bf16.msra.mxu0 0
      %1218 = vmatprep.subr.bf16.mxu0 0
      %1219 = vmatpush1.bf16.msra.mxu0 0
      %1220 = vmatprep.subr.bf16.mxu0 0
      %1221 = vmatpush1.bf16.msra.mxu0 0
      %1222 = vmatprep.mubr.bf16.mxu0 0
      %1223 = vmatmul.mubr.bf16.gmra.mrb[0].mxu0 %v1185
      %v1224 = vpop.f32.mrb[0].mxu0
      %v1225 = vadd.f32 %v1156, %v1224
      %v1226 = vpop.f32.mrb[0].mxu0
      %v1227 = vadd.f32 %v1156, %v1226
      %v1228 = vpop.f32.mrb[0].mxu0
      %v1229 = vadd.f32 %v1161, %v1228
      %v1230 = vpop.f32.mrb[0].mxu0
      %v1231 = vadd.f32 %v1161, %v1230
      %1232 = vmatprep.mubr.bf16.mxu0 0
      %1233 = vmatmul.mubr.bf16.gmra.mrb[0].mxu0 %v1188
      %v1234 = vpop.f32.mrb[0].mxu0
      %v1235 = vadd.f32 %v1166, %v1234
      %v1236 = vpop.f32.mrb[0].mxu0
      %v1237 = vadd.f32 %v1166, %v1236
      %v1238 = vpop.f32.mrb[0].mxu0
      %v1239 = vadd.f32 %v1171, %v1238
      %v1240 = vpop.f32.mrb[0].mxu0
      %v1241 = vadd.f32 %v1171, %v1240
      %1242 = vdwg.mxu0
      %v1243 = vadd.f32 %v1225, 3.0
      %v1244 = vadd.f32 %v1227, 3.0
      %v1245 = vadd.f32 %v1229, 3.0
      %v1246 = vadd.f32 %v1231, 3.0
      %v1247 = vadd.f32 %v1235, 3.0
      %v1248 = vadd.f32 %v1237, 3.0
      %v1249 = vadd.f32 %v1239, 3.0
      %v1250 = vadd.f32 %v1241, 3.0
      %v1251 = vmax.f32 %v1243, 0.0
      %v1252 = vmax.f32 %v1244, 0.0
      %v1253 = vmax.f32 %v1245, 0.0
      %v1254 = vmax.f32 %v1246, 0.0
      %v1255 = vmax.f32 %v1247, 0.0
      %v1256 = vmax.f32 %v1248, 0.0
      %v1257 = vmax.f32 %v1249, 0.0
      %v1258 = vmax.f32 %v1250, 0.0
      %v1259 = vmin.f32 %v1251, 6.0
      %v1260 = vmin.f32 %v1252, 6.0
      %v1261 = vmin.f32 %v1253, 6.0
      %v1262 = vmin.f32 %v1254, 6.0
      %v1263 = vmin.f32 %v1255, 6.0
      %v1264 = vmin.f32 %v1256, 6.0
      %v1265 = vmin.f32 %v1257, 6.0
      %v1266 = vmin.f32 %v1258, 6.0
      %v1267 = vmul.f32 %v1225, %v1259
      %v1268 = vmul.f32 %v1227, %v1260
      %v1269 = vmul.f32 %v1229, %v1261
      %v1270 = vmul.f32 %v1231, %v1262
      %v1271 = vmul.f32 %v1235, %v1263
      %v1272 = vmul.f32 %v1237, %v1264
      %v1273 = vmul.f32 %v1239, %v1265
      %v1274 = vmul.f32 %v1241, %v1266
      %v1275 = vmul.f32 %v1267, 0.16666667
      %v1276 = vmul.f32 %v1268, 0.16666667
      %v1277 = vmul.f32 %v1269, 0.16666667
      %v1278 = vmul.f32 %v1270, 0.16666667
      %v1279 = vmul.f32 %v1271, 0.16666667
      %v1280 = vmul.f32 %v1272, 0.16666667
      %v1281 = vmul.f32 %v1273, 0.16666667
      %v1282 = vmul.f32 %v1274, 0.16666667
      %1283 = vst [vmem:[%s224] sm:$0xff] %v1275
      %1284 = vst [vmem:[%s224 + $0x8] sm:$0xff] %v1276
      %1285 = vst [vmem:[%s224 + $0x10] sm:$0xff] %v1277
      %1286 = vst [vmem:[%s224 + $0x18] sm:$0xff] %v1278
      %1287 = vst [vmem:[%s224 + $0x20] sm:$0xff] %v1279
      %1288 = vst [vmem:[%s224 + $0x28] sm:$0xff] %v1280
      %1289 = vst [vmem:[%s224 + $0x30] sm:$0xff] %v1281
      %1290 = vst [vmem:[%s224 + $0x38] sm:$0xff] %v1282
      %p1291 = scmp.lt.s32.totalorder %s16, 1
      %s1292 = scalar_select %p1291, %s16, 1
      %s1293 = smul.addr %s1292, 8
      %s1294 = smul.addr %s1293, 8
      %s1295 = scalar_lea.vmem %s5, %s1294
      // Predicated region
      $region41: #{dwc_patch_embed.1} parent=39 // pred_check
        %p1296 = pneg %p144
      $region42: #{dwc_patch_embed.1} parent=39 // pred_check_branch
        %1298 = sbr.rel (%p1296) target = $region44
      $region43: #{dwc_patch_embed.1} parent=39 // pred_region
        _
      $region44: #{dwc_patch_embed.1} parent=39 // pred_fallthru
        _
    $region40: #{dwc_patch_embed.1} parent=5 // pred_fallthru
      _
    %p1299 = scmp.le.s32.totalorder 2, %s11
    // Predicated region
    $region45: #{dwc_patch_embed.1} parent=5 // pred_check
      %p1300 = pneg %p1299
    $region46: #{dwc_patch_embed.1} parent=5 // pred_check_branch
      %1302 = sbr.rel (%p1300) target = $region48
    $region47: #{dwc_patch_embed.1} parent=5 // pred_region
      %s1303 = ssub.s32 %s11, 2
      // Predicated region
      $region49: #{dwc_patch_embed.1} parent=47 // pred_check
        %p1304 = pneg %p150
      $region50: #{dwc_patch_embed.1} parent=47 // pred_check_branch
        %1306 = sbr.rel (%p1304) target = $region52
      $region51: #{dwc_patch_embed.1} parent=47 // pred_region
        %p1307 = scmp.lt.s32.totalorder %s17, 1
        %s1308 = scalar_select %p1307, %s17, 1
        %s1309 = smul.addr %s1308, 8
        %s1310 = smul.addr %s1309, 8
        %s1311 = scalar_lea.vmem %s5, %s1310
      $region52: #{dwc_patch_embed.1} parent=47 // pred_fallthru
        _
    $region48: #{dwc_patch_embed.1} parent=5 // pred_fallthru
      _
  $region6: #{dwc_patch_embed.1} parent=0 // loop_footer
    %s15 = sadd.s32 1, %s11
  $region7: #{dwc_patch_embed.1} parent=0 // loop_footer_branch
    %10 = sbr.rel target = $region3
  $region8: #{dwc_patch_embed.1} parent=0 // loop_exit
    _

</llo_original>
